<compile_context>
chip_gen: v6e
topology: v6e:2x2x1
jax: 0.10.0
libtpu: 0.0.40
codegen_flags: <defaults>
</compile_context>

<pallas_src>
import functools

import jax
import jax.numpy as jnp
from jax.experimental import pallas as pl
from jax.experimental.pallas import tpu as pltpu


def _gcn_kernel(*refs, k_sets, c_out, n_vert, t_tile, conv_first, temporal,
                compute_dtype):
    """One (batch row, T-tile) step of the fused conv + graph contraction.

    temporal=False refs: (x, w, bias, m_hbm, out, m_vmem, m_sem)
    temporal=True  refs: (x, x_prev_tile, x_next_tile, w, bias, a_prev_halo,
                          a_next_halo, m_hbm, out, m_vmem, m_sem)
    """
    if temporal:
        (x_ref, xp_ref, xn_ref, w_ref, b_ref, ap_ref, an_ref,
         m_hbm, o_ref, m_vmem, m_sem) = refs
    else:
        (x_ref, w_ref, b_ref, m_hbm, o_ref, m_vmem, m_sem) = refs

    # Single-buffer the grid-invariant per-tile block adjacency: manual DMA
    # into VMEM scratch.  The T-tile grid axis is "arbitrary" (serial on a
    # core), so program_id(1)==0 always executes before the first use on that
    # core, regardless of how the parallel N axis is split across cores.
    @pl.when(pl.program_id(1) == 0)
    def _():
        cp = pltpu.make_async_copy(m_hbm, m_vmem, m_sem.at[0])
        cp.start()
        cp.wait()

    x = x_ref[0]                                    # (C_in, Tt*V), lane-dense
    acc = b_ref[...].astype(jnp.float32)            # graph-folded conv bias

    # K is a tiny static constant -> unrolls into full-width MXU matmuls.
    for kk in range(k_sets):
        if conv_first:
            # C_in >= C_out: 1x1 conv first, then graph contraction.
            y_k = jnp.dot(w_ref[kk], x, preferred_element_type=jnp.float32)
            acc += jnp.dot(y_k.astype(compute_dtype), m_vmem[kk],
                           preferred_element_type=jnp.float32)
        else:
            # C_in < C_out: graph contraction first, so the (Tt*V)-deep matmul
            # runs over C_in rows instead of C_out (C_out/C_in fewer FLOPs).
            s_k = jnp.dot(x, m_vmem[kk], preferred_element_type=jnp.float32)
            acc += jnp.dot(w_ref[kk], s_k.astype(compute_dtype),
                           preferred_element_type=jnp.float32)

    o_ref[0] = acc.astype(o_ref.dtype)              # lane-dense (C_out, Tt*V) store

    if temporal:
        # Fused 0.8/0.1/0.1 blend: the within-tile shifts already live in the
        # off-diagonal V-blocks of m_vmem; only the two cross-tile edge
        # timesteps need a halo correction from the neighbouring x tiles.
        tt = pl.program_id(1)
        nt = pl.num_programs(1)
        edge = (t_tile - 1) * n_vert

        @pl.when(tt > 0)
        def _():
            xe = xp_ref[0, :, edge:]                # prev tile's last timestep
            h = jnp.zeros((c_out, n_vert), jnp.float32)
            for kk in range(k_sets):
                s = jnp.dot(xe, ap_ref[kk], preferred_element_type=jnp.float32)
                h = h + jnp.dot(w_ref[kk], s.astype(compute_dtype),
                                preferred_element_type=jnp.float32)
            o_ref[0, :, :n_vert] = (
                o_ref[0, :, :n_vert].astype(jnp.float32) + h).astype(o_ref.dtype)

        @pl.when(tt < nt - 1)
        def _():
            xe = xn_ref[0, :, :n_vert]              # next tile's first timestep
            h = jnp.zeros((c_out, n_vert), jnp.float32)
            for kk in range(k_sets):
                s = jnp.dot(xe, an_ref[kk], preferred_element_type=jnp.float32)
                h = h + jnp.dot(w_ref[kk], s.astype(compute_dtype),
                                preferred_element_type=jnp.float32)
            o_ref[0, :, edge:] = (
                o_ref[0, :, edge:].astype(jnp.float32) + h).astype(o_ref.dtype)


def _kron_t(s_tt, a_kvv):
    """kron over the T-tile axis: (Tt, Tt) x (K, V, V) -> (K, Tt*V, Tt*V)."""
    k, v, _ = a_kvv.shape
    tt = s_tt.shape[0]
    m = s_tt[None, :, None, :, None] * a_kvv[:, None, :, None, :]
    return m.reshape(k, tt * v, tt * v)


def _pick_t_tile(t, v, max_lanes=256):
    """Largest divisor of T with T_tile*V a multiple of 128 lanes (<= max_lanes)."""
    best, best_aligned = 1, None
    for d in range(1, t + 1):
        if t % d == 0 and d * v <= max_lanes:
            best = d
            if (d * v) % 128 == 0:
                best_aligned = d
    return best_aligned if best_aligned is not None else best


def _gcn_forward(x, A, weight, bias, *, temporal, t_tile=None,
                 compute_dtype=jnp.bfloat16):
    """x: (N, C_in, T, V); A: (K, V, V) or (3, K, V, V) -> (N, C_out, T, V)."""
    n, c_in, t, v = x.shape
    out_dtype = x.dtype
    if temporal:
        a_prev, a_cur, a_next = A[0], A[1], A[2]
        k_sets = A.shape[1]
    else:
        a_cur = A
        k_sets = A.shape[0]
    c_out = weight.shape[0] // k_sets

    t_tile = t_tile or _pick_t_tile(t, v)
    assert t % t_tile == 0, "T must be divisible by the T tile"
    nt = t // t_tile
    tv = t_tile * v

    # Free row-major reshape: native PyTorch NCTV layout, no transposes.
    x_flat = x.reshape(n, c_in, t * v).astype(compute_dtype)
    # (K, C_out, C_in): leading-K indexing in-kernel (bf16 sublane-safe).
    w_kci = weight.reshape(k_sets, c_out, c_in).astype(compute_dtype)

    # Per-tile block adjacency (same for every tile).  For TemporalWeight the
    # 0.8/0.1/0.1 +/-1-step blend is folded into the off-diagonal V-blocks.
    eye = jnp.eye(t_tile, dtype=jnp.float32)
    if temporal:
        m = (_kron_t(eye, 0.8 * a_cur)
             + _kron_t(jnp.eye(t_tile, k=1, dtype=jnp.float32), 0.1 * a_prev)
             + _kron_t(jnp.eye(t_tile, k=-1, dtype=jnp.float32), 0.1 * a_next))
    else:
        m = _kron_t(eye, a_cur)
    m = m.astype(compute_dtype)                     # (K, Tt*V, Tt*V)

    # Conv bias folded through the graph contraction (and through the blend's
    # sequence-edge gating); full-T in HBM, BlockSpec-sliced per tile.
    b_kc = bias.reshape(k_sets, c_out).astype(jnp.float32)
    if temporal:
        b_p = jnp.einsum("kc,kvw->cw", b_kc, a_prev)
        b_c = jnp.einsum("kc,kvw->cw", b_kc, a_cur)
        b_n = jnp.einsum("kc,kvw->cw", b_kc, a_next)
        gate_p = (jnp.arange(t) >= 1).astype(jnp.float32)[None, :, None]
        gate_n = (jnp.arange(t) <= t - 2).astype(jnp.float32)[None, :, None]
        bias_full = (0.8 * b_c[:, None, :]
                     + 0.1 * gate_p * b_p[:, None, :]
                     + 0.1 * gate_n * b_n[:, None, :]).reshape(c_out, t * v)
    else:
        b_c = jnp.einsum("kc,kvw->cw", b_kc, a_cur)
        bias_full = jnp.tile(b_c[:, None, :], (1, t, 1)).reshape(c_out, t * v)

    conv_first = c_in > c_out
    kernel = functools.partial(
        _gcn_kernel, k_sets=k_sets, c_out=c_out, n_vert=v, t_tile=t_tile,
        conv_first=conv_first, temporal=temporal, compute_dtype=compute_dtype)

    x_spec = pl.BlockSpec((1, c_in, tv), lambda i, j: (i, 0, j))
    w_spec = pl.BlockSpec((k_sets, c_out, c_in), lambda i, j: (0, 0, 0))
    b_spec = pl.BlockSpec((c_out, tv), lambda i, j: (0, j))
    m_spec = pl.BlockSpec(memory_space=pl.ANY)      # manual single-buffered DMA

    if temporal:
        xp_spec = pl.BlockSpec((1, c_in, tv),
                               lambda i, j: (i, 0, jnp.maximum(j - 1, 0)))
        xn_spec = pl.BlockSpec((1, c_in, tv),
                               lambda i, j: (i, 0, jnp.minimum(j + 1, nt - 1)))
        a_halo_spec = pl.BlockSpec((k_sets, v, v), lambda i, j: (0, 0, 0))
        in_specs = [x_spec, xp_spec, xn_spec, w_spec, b_spec,
                    a_halo_spec, a_halo_spec, m_spec]
        inputs = (x_flat, x_flat, x_flat, w_kci, bias_full,
                  (0.1 * a_prev).astype(compute_dtype),
                  (0.1 * a_next).astype(compute_dtype), m)
    else:
        in_specs = [x_spec, w_spec, b_spec, m_spec]
        inputs = (x_flat, w_kci, bias_full, m)

    out_flat = pl.pallas_call(
        kernel,
        out_shape=jax.ShapeDtypeStruct((n, c_out, t * v), out_dtype),
        grid_spec=pltpu.PrefetchScalarGridSpec(
            num_scalar_prefetch=0,
            grid=(n, nt),
            in_specs=in_specs,
            out_specs=pl.BlockSpec((1, c_out, tv), lambda i, j: (i, 0, j)),
            scratch_shapes=[
                pltpu.VMEM((k_sets, tv, tv), compute_dtype),  # single-buffered adjacency
                pltpu.SemaphoreType.DMA((1,)),
            ]),
        compiler_params=pltpu.CompilerParams(
            # N is megacore-parallel; the T-tile axis stays "arbitrary" so the
            # one-shot adjacency DMA runs on every core before first use.
            dimension_semantics=("parallel", "arbitrary"),
            vmem_limit_bytes=48 * 1024 * 1024),
    )(*inputs)

    # Free reshape back to (N, C_out, T, V).
    return out_flat.reshape(n, c_out, t, v)


def conv_temporal_graphical(x, A, weight, bias, kernel_size, Type="Origin",
                            *, t_tile=None, compute_dtype=jnp.bfloat16):
    """Mirrors ConvTemporalGraphical.forward (t_kernel_size=1 defaults).

    Returns (out, A, Type)."""
    if Type == "Origin":
        assert A.shape[0] == kernel_size
        out = _gcn_forward(x, A, weight, bias, temporal=False,
                           t_tile=t_tile, compute_dtype=compute_dtype)
        return out, A, Type
    elif Type == "TemporalWeight":
        # A: (3, K, V, V) with A[0]=previous, A[1]=current, A[2]=next.
        out = _gcn_forward(x, A, weight, bias, temporal=True,
                           t_tile=t_tile, compute_dtype=compute_dtype)
        return out, A, Type
    else:
        raise ValueError(f"unknown Type: {Type}")


# ----------------------------- pure-JAX references -----------------------------
def _ref_conv(x, weight, bias, k_sets):
    c_out = weight.shape[0] // k_sets
    y = jnp.einsum("oi,nitv->notv", weight, x) + bias[None, :, None, None]
    return y.reshape(x.shape[0], k_sets, c_out, x.shape[2], x.shape[3])


def _ref_origin(x, A, weight, bias):
    y = _ref_conv(x, weight, bias, A.shape[0])
    return jnp.einsum("nkctv,kvw->nctw", y, A)


def _ref_temporal(x, A3, weight, bias):
    y = _ref_conv(x, weight, bias, A3.shape[1])
    cur = jnp.einsum("nkctv,kvw->nctw", y, A3[1])
    prv = jnp.einsum("nkctv,kvw->nctw", y, A3[0])
    nxt = jnp.einsum("nkctv,kvw->nctw", y, A3[2])
    z = jnp.zeros_like(cur[:, :, :1, :])
    return (0.8 * cur
            + 0.1 * jnp.concatenate([z, prv[:, :, :-1, :]], axis=2)
            + 0.1 * jnp.concatenate([nxt[:, :, 1:, :], z], axis=2))


if __name__ == "__main__":
    # Small shapes: T*V = 256; t_tile=8 -> two 128-lane T tiles, which also
    # exercises the TemporalWeight cross-tile halo path.
    N, C_in, C_out, K, T, V = 2, 4, 8, 3, 16, 16

    key = jax.random.PRNGKey(0)
    k1, k2, k3, k4, k5 = jax.random.split(key, 5)
    x = jax.random.normal(k1, (N, C_in, T, V), dtype=jnp.float32)
    A = jax.random.normal(k2, (K, V, V), dtype=jnp.float32)
    weight = jax.random.normal(k3, (K * C_out, C_in), dtype=jnp.float32) * 0.1
    bias = jax.random.normal(k4, (K * C_out,), dtype=jnp.float32) * 0.1
    A3 = jax.random.normal(k5, (3, K, V, V), dtype=jnp.float32)

    # ---------------- 'Origin' path ----------------
    ref_o = _ref_origin(x, A, weight, bias)

    out_f32, A_out, typ = conv_temporal_graphical(
        x, A, weight, bias, K, Type="Origin", t_tile=8,
        compute_dtype=jnp.float32)
    out_f32 = jax.block_until_ready(out_f32)
    assert out_f32.shape == (N, C_out, T, V) and A_out.shape == (K, V, V)
    assert jnp.allclose(out_f32, ref_o, atol=1e-3, rtol=1e-3), "Origin f32 mismatch"

    out_bf, _, _ = conv_temporal_graphical(x, A, weight, bias, K,
                                           Type="Origin", t_tile=8)
    out_bf = jax.block_until_ready(out_bf)
    # bf16 inputs (f32 accumulation) -> loosened tolerance vs the f32 reference.
    assert jnp.allclose(out_bf, ref_o, atol=1e-1, rtol=5e-2), "Origin bf16 mismatch"

    # ---------------- 'TemporalWeight' path (2 T-tiles -> halo exercised) ----
    ref_t = _ref_temporal(x, A3, weight, bias)

    out_t32, _, _ = conv_temporal_graphical(
        x, A3, weight, bias, K, Type="TemporalWeight", t_tile=8,
        compute_dtype=jnp.float32)
    out_t32 = jax.block_until_ready(out_t32)
    assert out_t32.shape == (N, C_out, T, V)
    assert jnp.allclose(out_t32, ref_t, atol=1e-3, rtol=1e-3), "TemporalWeight f32 mismatch"

    out_tbf, _, _ = conv_temporal_graphical(x, A3, weight, bias, K,
                                            Type="TemporalWeight", t_tile=8)
    out_tbf = jax.block_until_ready(out_tbf)
    assert jnp.allclose(out_tbf, ref_t, atol=1e-1, rtol=5e-2), "TemporalWeight bf16 mismatch"

    # ---------------- conv-first contraction order (C_in > C_out) -----------
    C_in2, C_out2 = 8, 4
    x2 = jax.random.normal(k1, (N, C_in2, T, V), dtype=jnp.float32)
    w2 = jax.random.normal(k3, (K * C_out2, C_in2), dtype=jnp.float32) * 0.1
    b2 = jax.random.normal(k4, (K * C_out2,), dtype=jnp.float32) * 0.1
    ref2 = _ref_origin(x2, A, w2, b2)
    out2, _, _ = conv_temporal_graphical(
        x2, A, w2, b2, K, Type="Origin", t_tile=8, compute_dtype=jnp.float32)
    out2 = jax.block_until_ready(out2)
    assert jnp.allclose(out2, ref2, atol=1e-3, rtol=1e-3), "conv-first order mismatch"

    print("KERNEL_OK")
</pallas_src>

<mosaic_0001>
module attributes {stable_mosaic.version = 11 : i64} {
  func.func @_gcn_kernel(%arg0: i32, %arg1: i32, %arg2: memref<1x4x128xf32, #tpu.memory_space<vmem>>, %arg3: memref<3x8x4xf32, #tpu.memory_space<vmem>>, %arg4: memref<8x128xf32, #tpu.memory_space<vmem>>, %arg5: memref<3x128x128xf32, #tpu.memory_space<any>>, %arg6: memref<1x8x128xf32, #tpu.memory_space<vmem>>, %arg7: memref<3x128x128xf32, #tpu.memory_space<vmem>>, %arg8: memref<1x!tpu.dma_semaphore, #tpu.memory_space<semaphore_mem>>) attributes {dimension_semantics = [#tpu.dimension_semantics<parallel>, #tpu.dimension_semantics<arbitrary>], iteration_bounds = array<i64: 2, 2>, scalar_prefetch = 0 : i64, scratch_operands = 2 : i64, tpu.core_type = #tpu.core_type<tc>, window_params = [{transform_indices = @transform_0, window_bounds = array<i64: 1, 4, 128>}, {pipeline_mode = #tpu.pipeline_mode<synchronous>, transform_indices = @transform_1, window_bounds = array<i64: 3, 8, 4>}, {transform_indices = @transform_2, window_bounds = array<i64: 8, 128>}, {}, {transform_indices = @transform_4, window_bounds = array<i64: 1, 8, 128>}]} {
    %c0_i32 = arith.constant 0 : i32
    %0 = arith.cmpi eq, %arg1, %c0_i32 : i32
    %1 = arith.extui %0 : i1 to i32
    %c0_i32_0 = arith.constant 0 : i32
    %2 = arith.cmpi ne, %1, %c0_i32_0 : i32
    scf.if %2 {
      %c0_i32_29 = arith.constant 0 : i32
      %30 = tpu.memref_slice %arg8[%c0_i32_29] : memref<1x!tpu.dma_semaphore, #tpu.memory_space<semaphore_mem>> -> memref<1x!tpu.dma_semaphore, #tpu.memory_space<semaphore_mem>>
      %31 = tpu.memref_squeeze %30 : memref<1x!tpu.dma_semaphore, #tpu.memory_space<semaphore_mem>> -> memref<!tpu.dma_semaphore, #tpu.memory_space<semaphore_mem>>
      tpu.enqueue_dma source(%arg5 : memref<3x128x128xf32, #tpu.memory_space<any>>) target(%arg7 : memref<3x128x128xf32, #tpu.memory_space<vmem>>) target_semaphore(%31 : memref<!tpu.dma_semaphore, #tpu.memory_space<semaphore_mem>>)
      %c0_i32_30 = arith.constant 0 : i32
      %32 = tpu.memref_slice %arg8[%c0_i32_30] : memref<1x!tpu.dma_semaphore, #tpu.memory_space<semaphore_mem>> -> memref<1x!tpu.dma_semaphore, #tpu.memory_space<semaphore_mem>>
      %33 = tpu.memref_squeeze %32 : memref<1x!tpu.dma_semaphore, #tpu.memory_space<semaphore_mem>> -> memref<!tpu.dma_semaphore, #tpu.memory_space<semaphore_mem>>
      tpu.wait_dma2 semaphore(%33 : memref<!tpu.dma_semaphore, #tpu.memory_space<semaphore_mem>>) src(%arg5 : memref<3x128x128xf32, #tpu.memory_space<any>>) dst(%arg7 : memref<3x128x128xf32, #tpu.memory_space<vmem>>)
    } else {
    }
    %c0 = arith.constant 0 : index
    %c0_1 = arith.constant 0 : index
    %c0_2 = arith.constant 0 : index
    %3 = vector.load %arg2[%c0, %c0_1, %c0_2] : memref<1x4x128xf32, #tpu.memory_space<vmem>>, vector<1x4x128xf32>
    %4 = vector.shape_cast %3 : vector<1x4x128xf32> to vector<4x128xf32>
    %c0_3 = arith.constant 0 : index
    %c0_4 = arith.constant 0 : index
    %5 = vector.load %arg4[%c0_3, %c0_4] : memref<8x128xf32, #tpu.memory_space<vmem>>, vector<8x128xf32>
    %c0_5 = arith.constant 0 : index
    %c0_6 = arith.constant 0 : index
    %c0_7 = arith.constant 0 : index
    %6 = vector.load %arg7[%c0_5, %c0_6, %c0_7] : memref<3x128x128xf32, #tpu.memory_space<vmem>>, vector<1x128x128xf32>
    %7 = vector.shape_cast %6 : vector<1x128x128xf32> to vector<128x128xf32>
    %cst = arith.constant dense<0.000000e+00> : vector<4x128xf32>
    %8 = tpu.matmul %4, %7, %cst {dimension_numbers = #tpu.dot_dimension_numbers<[1], [0], [0], [1], [0, 0, 1, 1], [], []>} : vector<4x128xf32>, vector<128x128xf32>, vector<4x128xf32> -> vector<4x128xf32>
    %c0_8 = arith.constant 0 : index
    %c0_9 = arith.constant 0 : index
    %c0_10 = arith.constant 0 : index
    %9 = vector.load %arg3[%c0_8, %c0_9, %c0_10] : memref<3x8x4xf32, #tpu.memory_space<vmem>>, vector<1x8x4xf32>
    %10 = vector.shape_cast %9 : vector<1x8x4xf32> to vector<8x4xf32>
    %cst_11 = arith.constant dense<0.000000e+00> : vector<8x128xf32>
    %11 = tpu.matmul %10, %8, %cst_11 {dimension_numbers = #tpu.dot_dimension_numbers<[1], [0], [0], [1], [0, 0, 1, 1], [], []>} : vector<8x4xf32>, vector<4x128xf32>, vector<8x128xf32> -> vector<8x128xf32>
    %12 = arith.addf %5, %11 : vector<8x128xf32>
    %c1 = arith.constant 1 : index
    %c0_12 = arith.constant 0 : index
    %c0_13 = arith.constant 0 : index
    %13 = vector.load %arg7[%c1, %c0_12, %c0_13] : memref<3x128x128xf32, #tpu.memory_space<vmem>>, vector<1x128x128xf32>
    %14 = vector.shape_cast %13 : vector<1x128x128xf32> to vector<128x128xf32>
    %cst_14 = arith.constant dense<0.000000e+00> : vector<4x128xf32>
    %15 = tpu.matmul %4, %14, %cst_14 {dimension_numbers = #tpu.dot_dimension_numbers<[1], [0], [0], [1], [0, 0, 1, 1], [], []>} : vector<4x128xf32>, vector<128x128xf32>, vector<4x128xf32> -> vector<4x128xf32>
    %c1_15 = arith.constant 1 : index
    %c0_16 = arith.constant 0 : index
    %c0_17 = arith.constant 0 : index
    %16 = vector.load %arg3[%c1_15, %c0_16, %c0_17] : memref<3x8x4xf32, #tpu.memory_space<vmem>>, vector<1x8x4xf32>
    %17 = vector.shape_cast %16 : vector<1x8x4xf32> to vector<8x4xf32>
    %cst_18 = arith.constant dense<0.000000e+00> : vector<8x128xf32>
    %18 = tpu.matmul %17, %15, %cst_18 {dimension_numbers = #tpu.dot_dimension_numbers<[1], [0], [0], [1], [0, 0, 1, 1], [], []>} : vector<8x4xf32>, vector<4x128xf32>, vector<8x128xf32> -> vector<8x128xf32>
    %19 = arith.addf %12, %18 : vector<8x128xf32>
    %c2 = arith.constant 2 : index
    %c0_19 = arith.constant 0 : index
    %c0_20 = arith.constant 0 : index
    %20 = vector.load %arg7[%c2, %c0_19, %c0_20] : memref<3x128x128xf32, #tpu.memory_space<vmem>>, vector<1x128x128xf32>
    %21 = vector.shape_cast %20 : vector<1x128x128xf32> to vector<128x128xf32>
    %cst_21 = arith.constant dense<0.000000e+00> : vector<4x128xf32>
    %22 = tpu.matmul %4, %21, %cst_21 {dimension_numbers = #tpu.dot_dimension_numbers<[1], [0], [0], [1], [0, 0, 1, 1], [], []>} : vector<4x128xf32>, vector<128x128xf32>, vector<4x128xf32> -> vector<4x128xf32>
    %c2_22 = arith.constant 2 : index
    %c0_23 = arith.constant 0 : index
    %c0_24 = arith.constant 0 : index
    %23 = vector.load %arg3[%c2_22, %c0_23, %c0_24] : memref<3x8x4xf32, #tpu.memory_space<vmem>>, vector<1x8x4xf32>
    %24 = vector.shape_cast %23 : vector<1x8x4xf32> to vector<8x4xf32>
    %cst_25 = arith.constant dense<0.000000e+00> : vector<8x128xf32>
    %25 = tpu.matmul %24, %22, %cst_25 {dimension_numbers = #tpu.dot_dimension_numbers<[1], [0], [0], [1], [0, 0, 1, 1], [], []>} : vector<8x4xf32>, vector<4x128xf32>, vector<8x128xf32> -> vector<8x128xf32>
    %26 = arith.addf %19, %25 : vector<8x128xf32>
    %c0_26 = arith.constant 0 : index
    %c0_27 = arith.constant 0 : index
    %c0_28 = arith.constant 0 : index
    %27 = vector.load %arg6[%c0_26, %c0_27, %c0_28] : memref<1x8x128xf32, #tpu.memory_space<vmem>>, vector<1x8x128xf32>
    %28 = vector.shape_cast %27 : vector<1x8x128xf32> to vector<8x128xf32>
    %29 = vector.shape_cast %26 : vector<8x128xf32> to vector<1x8x128xf32>
    tpu.vector_store %arg6[%c0_26, %c0_27, %c0_28], %29 {strides = array<i32>} : memref<1x8x128xf32, #tpu.memory_space<vmem>>, vector<1x8x128xf32>,
    return
  }
  func.func @transform_0(%arg0: i32, %arg1: i32) -> (i32, i32, i32) {
    %c0_i32 = arith.constant 0 : i32
    %c0_i32_0 = arith.constant 0 : i32
    return %arg0, %c0_i32, %arg1 : i32, i32, i32
  }
  func.func @transform_1(%arg0: i32, %arg1: i32) -> (i32, i32, i32) {
    %c0_i32 = arith.constant 0 : i32
    %c0_i32_0 = arith.constant 0 : i32
    %c0_i32_1 = arith.constant 0 : i32
    %c0_i32_2 = arith.constant 0 : i32
    return %c0_i32, %c0_i32_0, %c0_i32_1 : i32, i32, i32
  }
  func.func @transform_2(%arg0: i32, %arg1: i32) -> (i32, i32) {
    %c0_i32 = arith.constant 0 : i32
    %c0_i32_0 = arith.constant 0 : i32
    return %c0_i32, %arg1 : i32, i32
  }
  func.func @transform_4(%arg0: i32, %arg1: i32) -> (i32, i32, i32) {
    %c0_i32 = arith.constant 0 : i32
    %c0_i32_0 = arith.constant 0 : i32
    return %arg0, %c0_i32, %arg1 : i32, i32, i32
  }
}

</mosaic_0001>

<llo_original>
// kernel: tpu_custom_call.1
$region0: #{tpu_custom_call.1}
  #allocation0 [shape = 'u32[]', space=smem, size = 0x4, offset = 0x4, fixed_abs, tag = 'smem constant byte address 0x4 - core index']
  #allocation1 [shape = 'u32[144,128]{1,0:T(1,128)}', space=vmem, size = 0x12000, scoped, tag = 'internal scratch']
  #allocation2 [shape = 'f32[3,128,128]{2,1,0:T(8,128)}', space=vmem, size = 0x30000, scoped, tag = 'scratch operand']
  #allocation3 [shape = 's32[1]{0}', space=sflag, size = 0x4, scoped, tag = 'scratch operand']
  #allocation6 [shape = 's32[]', space=sflag, size = 0x4, offset = 0, fixed_abs, tag = 'sflag constant byte address 0x0 - dummy sync flag']
  #allocation7 [shape = 's32[]', space=sflag, size = 0x4, offset = 0, fixed_abs, tag = 'sflag constant byte address 0x0 - dummy sync flag']
  #allocation8 [shape = 'u32[]', space=smem, size = 0x4, offset = 0x44, fixed_abs, tag = 'smem constant byte address 0x44 - assertion arg 0']
  #allocation9 [shape = 'u32[]', space=smem, size = 0x4, offset = 0x48, fixed_abs, tag = 'smem constant byte address 0x48 - assertion arg 1']
  %s0 = inlined_call_operand.vmem [shape: f32[2,4,256], index: 0, kind: input, shape index: {}]
  %s1 = inlined_call_operand.vmem [shape: f32[3,8,4], index: 1, kind: input, shape index: {}]
  %s2 = inlined_call_operand.vmem [shape: f32[8,256], index: 2, kind: input, shape index: {}]
  %s3 = inlined_call_operand.hbm [shape: f32[3,128,128], index: 3, kind: input, shape index: {}]
  %s4 = inlined_call_operand.hbm [shape: f32[2,8,256], index: 4, kind: output, shape index: {}]
  %s5 = sld [smem:[#allocation0]]
  $region53: #{tpu_custom_call.1} parent=0
    _
  %s7 = ssub.s32 1, %s5
  %s8 = scalar_select 0, %s7, %s5
  $region1: #{tpu_custom_call.1} parent=0
    #allocation4 [shape = 'u8[8192]{0}', space=vmem, size = 0x2000, scoped, tag = 'output window, operand 0']
    #allocation5 [shape = 's32[2]{0}', space=sflag, size = 0x8, scoped, tag = 'scoped memory for tpu_custom_call.1']
    %9 = vsyncpa [#allocation5], 0
    %s10 = scalar_lea.sflag [#allocation5], 1
    %11 = vsyncpa %s10, 0
    loop: start=0, step=1, limit=6
    $region2: #{tpu_custom_call.1} parent=1 // loop_pre_header
      _
    $region3: #{tpu_custom_call.1} parent=1 // loop_header
      %s13 = sphi 0, %s17
      %p14 = scmp.ge.s32.totalorder %s13, 6
      %s20 = sphi 0, %s32
      %s21 = sphi 0, %s28
      %s22 = sphi 0, %s20
      %s23 = sphi 0, %s21
      %s24 = sphi 0, %s22
      %s25 = sphi 0, %s23
      %s37 = sphi 0, %s39
      %s40 = sphi 0, %s37
      %s41 = sphi 0, %s40
      %s57 = sphi 0, %s41
      %s61 = sphi 0, %s61
      %s63 = sphi 0, %s61
      %s64 = sphi 0, %s63
      %s78 = sphi 0, %s64
      %s84 = sphi 0, %s86
      %s87 = sphi 0, %s84
      %s88 = sphi 0, %s87
      %s104 = sphi 0, %s88
      %s112 = sphi 0, %s114
      %s115 = sphi 0, %s112
      %s116 = sphi 0, %s115
      %s132 = sphi 0, %s116
    $region4: #{tpu_custom_call.1} parent=1 // loop_header_branch
      %16 = sbr.rel (%p14) target = $region8
    $region5: #{tpu_custom_call.1} parent=1 // loop_body
      %s18 = ssub.s32 %s13, 1
      %s19 = ssub.s32 %s13, 2
      %s26 = sadd.s32 1, %s21
      %p27 = scmp.ge.s32.totalorder %s26, 2
      %s28 = scalar_select %p27, 0, %s26
      %s29 = sadd.s32 1, %s20
      %s30 = scalar_select %p27, %s29, %s20
      %p31 = scmp.ge.s32.totalorder %s30, 2
      %s32 = scalar_select %p31, 0, %s30
      %s33 = ssub.s32 %s20, %s32
      %s34 = ssub.s32 %s21, %s28
      %s35 = sor.u32 %s33, %s34
      %p36 = scmp.eq.s32.totalorder %s35, 0
      %s38 = sadd.s32 %s37, 1
      %s39 = scalar_select %p36, %s37, %s38
      %p42 = pneg %p36
      %p43 = scmp.eq.s32.totalorder %s13, 3
      %p44 = por %p42, %p43
      %p45 = scmp.ne.s32.totalorder %s37, %s40
      %p46 = scmp.eq.s32.totalorder %s13, 0
      %p47 = por %p45, %p46
      %p48 = scmp.ne.s32.totalorder %s37, %s40
      %p49 = scmp.eq.s32.totalorder %s18, 3
      %p50 = por %p48, %p49
      %p51 = scmp.ne.s32.totalorder %s40, %s41
      %p52 = scmp.eq.s32.totalorder %s18, 0
      %p53 = por %p51, %p52
      %p54 = scmp.ne.s32.totalorder %s40, %s41
      %p55 = scmp.eq.s32.totalorder %s19, 3
      %p56 = por %p54, %p55
      %p58 = scmp.ne.s32.totalorder %s41, %s57
      %p59 = scmp.eq.s32.totalorder %s19, 0
      %p60 = por %p58, %p59
      %s62 = sadd.s32 %s61, 1
      %p65 = scmp.eq.s32.totalorder %s13, 3
      %p66 = scmp.ne.s32.totalorder %s61, %s63
      %p67 = scmp.eq.s32.totalorder %s13, 0
      %p68 = por %p66, %p67
      %p69 = scmp.ne.s32.totalorder %s61, %s63
      %p70 = scmp.eq.s32.totalorder %s18, 3
      %p71 = por %p69, %p70
      %p72 = scmp.ne.s32.totalorder %s63, %s64
      %p73 = scmp.eq.s32.totalorder %s18, 0
      %p74 = por %p72, %p73
      %p75 = scmp.ne.s32.totalorder %s63, %s64
      %p76 = scmp.eq.s32.totalorder %s19, 3
      %p77 = por %p75, %p76
      %p79 = scmp.ne.s32.totalorder %s64, %s78
      %p80 = scmp.eq.s32.totalorder %s19, 0
      %p81 = por %p79, %p80
      %s82 = ssub.s32 %s21, %s28
      %p83 = scmp.eq.s32.totalorder %s82, 0
      %s85 = sadd.s32 %s84, 1
      %s86 = scalar_select %p83, %s84, %s85
      %p89 = pneg %p83
      %p90 = scmp.eq.s32.totalorder %s13, 3
      %p91 = por %p89, %p90
      %p92 = scmp.ne.s32.totalorder %s84, %s87
      %p93 = scmp.eq.s32.totalorder %s13, 0
      %p94 = por %p92, %p93
      %p95 = scmp.ne.s32.totalorder %s84, %s87
      %p96 = scmp.eq.s32.totalorder %s18, 3
      %p97 = por %p95, %p96
      %p98 = scmp.ne.s32.totalorder %s87, %s88
      %p99 = scmp.eq.s32.totalorder %s18, 0
      %p100 = por %p98, %p99
      %p101 = scmp.ne.s32.totalorder %s87, %s88
      %p102 = scmp.eq.s32.totalorder %s19, 3
      %p103 = por %p101, %p102
      %p105 = scmp.ne.s32.totalorder %s88, %s104
      %p106 = scmp.eq.s32.totalorder %s19, 0
      %p107 = por %p105, %p106
      %s108 = ssub.s32 %s20, %s32
      %s109 = ssub.s32 %s21, %s28
      %s110 = sor.u32 %s108, %s109
      %p111 = scmp.eq.s32.totalorder %s110, 0
      %s113 = sadd.s32 %s112, 1
      %s114 = scalar_select %p111, %s112, %s113
      %p117 = pneg %p111
      %p118 = scmp.eq.s32.totalorder %s13, 3
      %p119 = por %p117, %p118
      %p120 = scmp.ne.s32.totalorder %s112, %s115
      %p121 = scmp.eq.s32.totalorder %s13, 0
      %p122 = por %p120, %p121
      %p123 = scmp.ne.s32.totalorder %s112, %s115
      %p124 = scmp.eq.s32.totalorder %s18, 3
      %p125 = por %p123, %p124
      %p126 = scmp.ne.s32.totalorder %s115, %s116
      %p127 = scmp.eq.s32.totalorder %s18, 0
      %p128 = por %p126, %p127
      %p129 = scmp.ne.s32.totalorder %s115, %s116
      %p130 = scmp.eq.s32.totalorder %s19, 3
      %p131 = por %p129, %p130
      %p133 = scmp.ne.s32.totalorder %s116, %s132
      %p134 = scmp.eq.s32.totalorder %s19, 0
      %p135 = por %p133, %p134
      %p136 = scmp.le.s32.totalorder 1, %s13
      %p137 = scmp.lt.s32.totalorder %s13, 5
      %p138 = pnand %p136, %p137
      %p139 = pneg %p138
      // Predicated region
      $region9: #{tpu_custom_call.1} parent=5 // pred_check
        _
      $region10: #{tpu_custom_call.1} parent=5 // pred_check_branch
        %141 = sbr.rel (%p138) target = $region12
      $region11: #{tpu_custom_call.1} parent=5 // pred_region
        %s142 = ssub.s32 %s13, 1
        // Predicated region
        $region13: #{tpu_custom_call.1} parent=11 // pred_check
          %p143 = pneg %p74
        $region14: #{tpu_custom_call.1} parent=11 // pred_check_branch
          %145 = sbr.rel (%p143) target = $region16
        $region15: #{tpu_custom_call.1} parent=11 // pred_region
          _
        $region16: #{tpu_custom_call.1} parent=11 // pred_fallthru
          _
      $region12: #{tpu_custom_call.1} parent=5 // pred_fallthru
        _
      %p146 = scmp.lt.s32.totalorder %s13, 4
      // Predicated region
      $region17: #{tpu_custom_call.1} parent=5 // pred_check
        %p147 = pneg %p146
      $region18: #{tpu_custom_call.1} parent=5 // pred_check_branch
        %149 = sbr.rel (%p147) target = $region20
      $region19: #{tpu_custom_call.1} parent=5 // pred_region
        // Predicated region
        $region21: #{tpu_custom_call.1} parent=19 // pred_check
          %p150 = pneg %p47
        $region22: #{tpu_custom_call.1} parent=19 // pred_check_branch
          %152 = sbr.rel (%p150) target = $region24
        $region23: #{tpu_custom_call.1} parent=19 // pred_region
          %p153 = scmp.lt.s32.totalorder %s20, 1
          %s154 = scalar_select %p153, %s20, 1
          %p155 = scmp.lt.s32.totalorder %s21, 1
          %s156 = scalar_select %p155, %s21, 1
          %s157 = smul.addr %s154, 2
          %s158 = sadd.s32 %s156, %s157
          %s159 = smul.addr %s158, 4
          %s160 = scalar_lea.vmem %s0, %s159
        $region24: #{tpu_custom_call.1} parent=19 // pred_fallthru
          _
        // Predicated region
        $region25: #{tpu_custom_call.1} parent=19 // pred_check
          %p161 = pneg %p94
        $region26: #{tpu_custom_call.1} parent=19 // pred_check_branch
          %163 = sbr.rel (%p161) target = $region28
        $region27: #{tpu_custom_call.1} parent=19 // pred_region
          %p164 = scmp.lt.s32.totalorder %s21, 1
          %s165 = scalar_select %p164, %s21, 1
          %s166 = smul.addr %s165, 8
          %s167 = scalar_lea.vmem %s2, %s166
        $region28: #{tpu_custom_call.1} parent=19 // pred_fallthru
          _
      $region20: #{tpu_custom_call.1} parent=5 // pred_fallthru
        _
      %p168 = scmp.le.s32.totalorder 1, %s13
      %p169 = scmp.lt.s32.totalorder %s13, 5
      %p170 = pnand %p168, %p169
      %p171 = pneg %p170
      // Predicated region
      $region29: #{tpu_custom_call.1} parent=5 // pred_check
        _
      $region30: #{tpu_custom_call.1} parent=5 // pred_check_branch
        %173 = sbr.rel (%p170) target = $region32
      $region31: #{tpu_custom_call.1} parent=5 // pred_region
        %s174 = ssub.s32 %s13, 1
        %p175 = scmp.lt.s32.totalorder %s22, 1
        %s176 = scalar_select %p175, %s22, 1
        %p177 = scmp.lt.s32.totalorder %s23, 1
        %s178 = scalar_select %p177, %s23, 1
        %s179 = smul.addr %s176, 2
        %s180 = sadd.s32 %s178, %s179
        %s181 = smul.addr %s180, 4
        %s182 = scalar_lea.vmem %s0, %s181
        %p183 = pneg %p53
        %p184 = pneg %p50
        %p185 = pneg %p74
        %p186 = pneg %p71
        %p187 = scmp.lt.s32.totalorder %s23, 1
        %s188 = scalar_select %p187, %s23, 1
        %s189 = smul.addr %s188, 8
        %s190 = scalar_lea.vmem %s2, %s189
        %p191 = pneg %p100
        %p192 = pneg %p97
        %p193 = pneg %p128
        %p194 = pneg %p125
        %s195 = sand.u32 %s115, 1
        %s196 = scalar_lea.sflag [#allocation5], %s195
        %s197 = sand.u32 %s115, 1
        %s198 = smul.addr %s197, 8
        %s199 = scalar_lea.vmem [#allocation4], %s198
        %p200 = scmp.lt.s32.totalorder %s22, 1
        %s201 = scalar_select %p200, %s22, 1
        %p202 = scmp.lt.s32.totalorder %s23, 1
        %s203 = scalar_select %p202, %s23, 1
        %s204 = smul.addr %s201, 2
        %s205 = sadd.s32 %s203, %s204
        %s206 = smul.addr %s205, 4
        %s207 = scalar_lea.vmem %s0, %s206
        %p208 = scmp.lt.s32.totalorder %s23, 1
        %s209 = scalar_select %p208, %s23, 1
        %s210 = smul.addr %s209, 8
        %s211 = scalar_lea.vmem %s2, %s210
        %p212 = scmp.eq.s32.totalorder %s23, 0
        // Predicated region
        $region33: #{tpu_custom_call.1} parent=31 // pred_check
          %p213 = pneg %p212
        $region34: #{tpu_custom_call.1} parent=31 // pred_check_branch
          %215 = sbr.rel (%p213) target = $region36
        $region35: #{tpu_custom_call.1} parent=31 // pred_region
          // Predicated region
          $region37: #{tpu_custom_call.1} parent=35 // pred_check
            _
          $region38: #{tpu_custom_call.1} parent=35 // pred_check_branch
            %217 = sbr.rel target = $region40
          $region39: #{tpu_custom_call.1} parent=35 // pred_region
            %218 = sst [smem:[#allocation8]] [#allocation7]
            %219 = sst [smem:[#allocation9]] [#allocation6]
          $region40: #{tpu_custom_call.1} parent=35 // pred_fallthru
            _
          %221 = shalt.err (0)
          %s223 = sshll.u32 [#allocation2], 4
          %s224 = int_to_ptr.vmem [resolvable:$true] %s223
          %226 = dma.hbm_to_vmem [thread:$0]  %s3, 6144, %s224, [#allocation3]
          %s227 = smul.u32 3, 128
          %s228 = smul.u32 %s227, 1
          %s229 = sshll.u32 %s228, 4
          %230 = dma.done [#allocation3], %s229
        $region36: #{tpu_custom_call.1} parent=31 // pred_fallthru
          _
        %v231 = vld [vmem:[%s207] sm:$0xf]
        %v232 = vld [vmem:[%s211] sm:$0xff]
        %v233 = vld [vmem:[#allocation2] sm:$0xff]
        %v234 = vld [vmem:[#allocation2 + $0x8] sm:$0xff]
        %v235 = vld [vmem:[#allocation2 + $0x10] sm:$0xff]
        %v236 = vld [vmem:[#allocation2 + $0x18] sm:$0xff]
        %v237 = vld [vmem:[#allocation2 + $0x20] sm:$0xff]
        %v238 = vld [vmem:[#allocation2 + $0x28] sm:$0xff]
        %v239 = vld [vmem:[#allocation2 + $0x30] sm:$0xff]
        %v240 = vld [vmem:[#allocation2 + $0x38] sm:$0xff]
        %v241 = vld [vmem:[#allocation2 + $0x40] sm:$0xff]
        %v242 = vld [vmem:[#allocation2 + $0x48] sm:$0xff]
        %v243 = vld [vmem:[#allocation2 + $0x50] sm:$0xff]
        %v244 = vld [vmem:[#allocation2 + $0x58] sm:$0xff]
        %v245 = vld [vmem:[#allocation2 + $0x60] sm:$0xff]
        %v246 = vld [vmem:[#allocation2 + $0x68] sm:$0xff]
        %v247 = vld [vmem:[#allocation2 + $0x70] sm:$0xff]
        %v248 = vld [vmem:[#allocation2 + $0x78] sm:$0xff]
        %249 = vmatprep.subr.mxu0 0.0
        %250 = vmatpush1.msra.mxu0 %v248
        %251 = vmatprep.subr.mxu0 0.0
        %252 = vmatpush1.msra.mxu0 %v247
        %253 = vmatprep.subr.mxu0 0.0
        %254 = vmatpush1.msra.mxu0 %v246
        %255 = vmatprep.subr.mxu0 0.0
        %256 = vmatpush1.msra.mxu0 %v245
        %257 = vmatprep.subr.mxu0 0.0
        %258 = vmatpush1.msra.mxu0 %v244
        %259 = vmatprep.subr.mxu0 0.0
        %260 = vmatpush1.msra.mxu0 %v243
        %261 = vmatprep.subr.mxu0 0.0
        %262 = vmatpush1.msra.mxu0 %v242
        %263 = vmatprep.subr.mxu0 0.0
        %264 = vmatpush1.msra.mxu0 %v241
        %265 = vmatprep.subr.mxu0 0.0
        %266 = vmatpush1.msra.mxu0 %v240
        %267 = vmatprep.subr.mxu0 0.0
        %268 = vmatpush1.msra.mxu0 %v239
        %269 = vmatprep.subr.mxu0 0.0
        %270 = vmatpush1.msra.mxu0 %v238
        %271 = vmatprep.subr.mxu0 0.0
        %272 = vmatpush1.msra.mxu0 %v237
        %273 = vmatprep.subr.mxu0 0.0
        %274 = vmatpush1.msra.mxu0 %v236
        %275 = vmatprep.subr.mxu0 0.0
        %276 = vmatpush1.msra.mxu0 %v235
        %277 = vmatprep.subr.mxu0 0.0
        %278 = vmatpush1.msra.mxu0 %v234
        %279 = vmatprep.subr.mxu0 0.0
        %280 = vmatpush1.msra.mxu0 %v233
        %281 = vmatprep.subr.mxu0 0.0
        %282 = vmatpush2.msra.mxu0 0.0
        %283 = vmatprep.subr.mxu0 0.0
        %284 = vmatpush2.msra.mxu0 0.0
        %285 = vmatprep.subr.mxu0 0.0
        %286 = vmatpush2.msra.mxu0 0.0
        %287 = vmatprep.subr.mxu0 0.0
        %288 = vmatpush2.msra.mxu0 0.0
        %289 = vmatprep.subr.mxu0 0.0
        %290 = vmatpush2.msra.mxu0 0.0
        %291 = vmatprep.subr.mxu0 0.0
        %292 = vmatpush2.msra.mxu0 0.0
        %293 = vmatprep.subr.mxu0 0.0
        %294 = vmatpush2.msra.mxu0 0.0
        %295 = vmatprep.subr.mxu0 0.0
        %296 = vmatpush2.msra.mxu0 0.0
        %297 = vmatprep.subr.mxu0 0.0
        %298 = vmatpush2.msra.mxu0 0.0
        %299 = vmatprep.subr.mxu0 0.0
        %300 = vmatpush2.msra.mxu0 0.0
        %301 = vmatprep.subr.mxu0 0.0
        %302 = vmatpush2.msra.mxu0 0.0
        %303 = vmatprep.subr.mxu0 0.0
        %304 = vmatpush2.msra.mxu0 0.0
        %305 = vmatprep.subr.mxu0 0.0
        %306 = vmatpush2.msra.mxu0 0.0
        %307 = vmatprep.subr.mxu0 0.0
        %308 = vmatpush2.msra.mxu0 0.0
        %309 = vmatprep.subr.mxu0 0.0
        %310 = vmatpush2.msra.mxu0 0.0
        %311 = vmatprep.subr.mxu0 0.0
        %312 = vmatpush2.msra.mxu0 0.0
        %313 = vmatprep.mubr.f32.mxu0 0.0
        %314 = vmatmul.mubr.f32.gmra.mxu0 %v231
        %v315 = vpop.f32.mrf.mxu0
        %v316 = vadd.f32 0.0, %v315
        %v317 = vpop.f32.mrf.mxu0
        %318 = vdwg.mxu0
        %v319 = vld [vmem:[%s1] sm:$0xff]
        %vm320 = vcmask 31744
        %v322 = vsel %vm320, %v319, 0
        %vm324 = vcmask 1043456
        %v326 = vsel %vm324, %v316, 0
        %328 = vmatprep.subr.mxu0 0.0
        %329 = vmatpush1.msra.mxu0 0.0
        %330 = vmatprep.subr.mxu0 0.0
        %331 = vmatpush1.msra.mxu0 0.0
        %332 = vmatprep.subr.mxu0 0.0
        %333 = vmatpush1.msra.mxu0 0.0
        %334 = vmatprep.subr.mxu0 0.0
        %335 = vmatpush1.msra.mxu0 0.0
        %336 = vmatprep.subr.mxu0 0.0
        %337 = vmatpush1.msra.mxu0 0.0
        %338 = vmatprep.subr.mxu0 0.0
        %339 = vmatpush1.msra.mxu0 0.0
        %340 = vmatprep.subr.mxu0 0.0
        %341 = vmatpush1.msra.mxu0 0.0
        %342 = vmatprep.subr.mxu0 0.0
        %343 = vmatpush1.msra.mxu0 0.0
        %344 = vmatprep.subr.mxu0 0.0
        %345 = vmatpush1.msra.mxu0 0.0
        %346 = vmatprep.subr.mxu0 0.0
        %347 = vmatpush1.msra.mxu0 0.0
        %348 = vmatprep.subr.mxu0 0.0
        %349 = vmatpush1.msra.mxu0 0.0
        %350 = vmatprep.subr.mxu0 0.0
        %351 = vmatpush1.msra.mxu0 0.0
        %352 = vmatprep.subr.mxu0 0.0
        %353 = vmatpush1.msra.mxu0 0.0
        %354 = vmatprep.subr.mxu0 0.0
        %355 = vmatpush1.msra.mxu0 0.0
        %356 = vmatprep.subr.mxu0 0.0
        %357 = vmatpush1.msra.mxu0 0.0
        %358 = vmatprep.subr.mxu0 0.0
        %359 = vmatpush1.msra.mxu0 %v326
        %360 = vmatprep.subr.mxu0 0.0
        %361 = vmatpush2.msra.mxu0 0.0
        %362 = vmatprep.subr.mxu0 0.0
        %363 = vmatpush2.msra.mxu0 0.0
        %364 = vmatprep.subr.mxu0 0.0
        %365 = vmatpush2.msra.mxu0 0.0
        %366 = vmatprep.subr.mxu0 0.0
        %367 = vmatpush2.msra.mxu0 0.0
        %368 = vmatprep.subr.mxu0 0.0
        %369 = vmatpush2.msra.mxu0 0.0
        %370 = vmatprep.subr.mxu0 0.0
        %371 = vmatpush2.msra.mxu0 0.0
        %372 = vmatprep.subr.mxu0 0.0
        %373 = vmatpush2.msra.mxu0 0.0
        %374 = vmatprep.subr.mxu0 0.0
        %375 = vmatpush2.msra.mxu0 0.0
        %376 = vmatprep.subr.mxu0 0.0
        %377 = vmatpush2.msra.mxu0 0.0
        %378 = vmatprep.subr.mxu0 0.0
        %379 = vmatpush2.msra.mxu0 0.0
        %380 = vmatprep.subr.mxu0 0.0
        %381 = vmatpush2.msra.mxu0 0.0
        %382 = vmatprep.subr.mxu0 0.0
        %383 = vmatpush2.msra.mxu0 0.0
        %384 = vmatprep.subr.mxu0 0.0
        %385 = vmatpush2.msra.mxu0 0.0
        %386 = vmatprep.subr.mxu0 0.0
        %387 = vmatpush2.msra.mxu0 0.0
        %388 = vmatprep.subr.mxu0 0.0
        %389 = vmatpush2.msra.mxu0 0.0
        %390 = vmatprep.subr.mxu0 0.0
        %391 = vmatpush2.msra.mxu0 0.0
        %392 = vmatprep.mubr.f32.mxu0 0.0
        %393 = vmatmul.mubr.f32.gmra.mxu0 %v322
        %v394 = vpop.f32.mrf.mxu0
        %v395 = vadd.f32 0.0, %v394
        %v396 = vpop.f32.mrf.mxu0
        %397 = vdwg.mxu0
        %v398 = vadd.f32 %v232, %v395
        %s399 = scalar_lea.vmem [#allocation2], 128
        %v400 = vld [vmem:[%s399] sm:$0xff]
        %v401 = vld [vmem:[%s399 + $0x8] sm:$0xff]
        %v402 = vld [vmem:[%s399 + $0x10] sm:$0xff]
        %v403 = vld [vmem:[%s399 + $0x18] sm:$0xff]
        %v404 = vld [vmem:[%s399 + $0x20] sm:$0xff]
        %v405 = vld [vmem:[%s399 + $0x28] sm:$0xff]
        %v406 = vld [vmem:[%s399 + $0x30] sm:$0xff]
        %v407 = vld [vmem:[%s399 + $0x38] sm:$0xff]
        %v408 = vld [vmem:[%s399 + $0x40] sm:$0xff]
        %v409 = vld [vmem:[%s399 + $0x48] sm:$0xff]
        %v410 = vld [vmem:[%s399 + $0x50] sm:$0xff]
        %v411 = vld [vmem:[%s399 + $0x58] sm:$0xff]
        %v412 = vld [vmem:[%s399 + $0x60] sm:$0xff]
        %v413 = vld [vmem:[%s399 + $0x68] sm:$0xff]
        %v414 = vld [vmem:[%s399 + $0x70] sm:$0xff]
        %v415 = vld [vmem:[%s399 + $0x78] sm:$0xff]
        %416 = vmatprep.subr.mxu0 0.0
        %417 = vmatpush1.msra.mxu0 %v415
        %418 = vmatprep.subr.mxu0 0.0
        %419 = vmatpush1.msra.mxu0 %v414
        %420 = vmatprep.subr.mxu0 0.0
        %421 = vmatpush1.msra.mxu0 %v413
        %422 = vmatprep.subr.mxu0 0.0
        %423 = vmatpush1.msra.mxu0 %v412
        %424 = vmatprep.subr.mxu0 0.0
        %425 = vmatpush1.msra.mxu0 %v411
        %426 = vmatprep.subr.mxu0 0.0
        %427 = vmatpush1.msra.mxu0 %v410
        %428 = vmatprep.subr.mxu0 0.0
        %429 = vmatpush1.msra.mxu0 %v409
        %430 = vmatprep.subr.mxu0 0.0
        %431 = vmatpush1.msra.mxu0 %v408
        %432 = vmatprep.subr.mxu0 0.0
        %433 = vmatpush1.msra.mxu0 %v407
        %434 = vmatprep.subr.mxu0 0.0
        %435 = vmatpush1.msra.mxu0 %v406
        %436 = vmatprep.subr.mxu0 0.0
        %437 = vmatpush1.msra.mxu0 %v405
        %438 = vmatprep.subr.mxu0 0.0
        %439 = vmatpush1.msra.mxu0 %v404
        %440 = vmatprep.subr.mxu0 0.0
        %441 = vmatpush1.msra.mxu0 %v403
        %442 = vmatprep.subr.mxu0 0.0
        %443 = vmatpush1.msra.mxu0 %v402
        %444 = vmatprep.subr.mxu0 0.0
        %445 = vmatpush1.msra.mxu0 %v401
        %446 = vmatprep.subr.mxu0 0.0
        %447 = vmatpush1.msra.mxu0 %v400
        %448 = vmatprep.subr.mxu0 0.0
        %449 = vmatpush2.msra.mxu0 0.0
        %450 = vmatprep.subr.mxu0 0.0
        %451 = vmatpush2.msra.mxu0 0.0
        %452 = vmatprep.subr.mxu0 0.0
        %453 = vmatpush2.msra.mxu0 0.0
        %454 = vmatprep.subr.mxu0 0.0
        %455 = vmatpush2.msra.mxu0 0.0
        %456 = vmatprep.subr.mxu0 0.0
        %457 = vmatpush2.msra.mxu0 0.0
        %458 = vmatprep.subr.mxu0 0.0
        %459 = vmatpush2.msra.mxu0 0.0
        %460 = vmatprep.subr.mxu0 0.0
        %461 = vmatpush2.msra.mxu0 0.0
        %462 = vmatprep.subr.mxu0 0.0
        %463 = vmatpush2.msra.mxu0 0.0
        %464 = vmatprep.subr.mxu0 0.0
        %465 = vmatpush2.msra.mxu0 0.0
        %466 = vmatprep.subr.mxu0 0.0
        %467 = vmatpush2.msra.mxu0 0.0
        %468 = vmatprep.subr.mxu0 0.0
        %469 = vmatpush2.msra.mxu0 0.0
        %470 = vmatprep.subr.mxu0 0.0
        %471 = vmatpush2.msra.mxu0 0.0
        %472 = vmatprep.subr.mxu0 0.0
        %473 = vmatpush2.msra.mxu0 0.0
        %474 = vmatprep.subr.mxu0 0.0
        %475 = vmatpush2.msra.mxu0 0.0
        %476 = vmatprep.subr.mxu0 0.0
        %477 = vmatpush2.msra.mxu0 0.0
        %478 = vmatprep.subr.mxu0 0.0
        %479 = vmatpush2.msra.mxu0 0.0
        %480 = vmatprep.mubr.f32.mxu0 0.0
        %481 = vmatmul.mubr.f32.gmra.mxu0 %v231
        %v482 = vpop.f32.mrf.mxu0
        %v483 = vadd.f32 0.0, %v482
        %v484 = vpop.f32.mrf.mxu0
        %485 = vdwg.mxu0
        %s486 = scalar_lea.vmem %s1, 8
        %v487 = vld [vmem:[%s486] sm:$0xff]
        %v489 = vsel %vm320, %v487, 0
        %v492 = vsel %vm324, %v483, 0
        %494 = vmatprep.subr.mxu0 0.0
        %495 = vmatpush1.msra.mxu0 0.0
        %496 = vmatprep.subr.mxu0 0.0
        %497 = vmatpush1.msra.mxu0 0.0
        %498 = vmatprep.subr.mxu0 0.0
        %499 = vmatpush1.msra.mxu0 0.0
        %500 = vmatprep.subr.mxu0 0.0
        %501 = vmatpush1.msra.mxu0 0.0
        %502 = vmatprep.subr.mxu0 0.0
        %503 = vmatpush1.msra.mxu0 0.0
        %504 = vmatprep.subr.mxu0 0.0
        %505 = vmatpush1.msra.mxu0 0.0
        %506 = vmatprep.subr.mxu0 0.0
        %507 = vmatpush1.msra.mxu0 0.0
        %508 = vmatprep.subr.mxu0 0.0
        %509 = vmatpush1.msra.mxu0 0.0
        %510 = vmatprep.subr.mxu0 0.0
        %511 = vmatpush1.msra.mxu0 0.0
        %512 = vmatprep.subr.mxu0 0.0
        %513 = vmatpush1.msra.mxu0 0.0
        %514 = vmatprep.subr.mxu0 0.0
        %515 = vmatpush1.msra.mxu0 0.0
        %516 = vmatprep.subr.mxu0 0.0
        %517 = vmatpush1.msra.mxu0 0.0
        %518 = vmatprep.subr.mxu0 0.0
        %519 = vmatpush1.msra.mxu0 0.0
        %520 = vmatprep.subr.mxu0 0.0
        %521 = vmatpush1.msra.mxu0 0.0
        %522 = vmatprep.subr.mxu0 0.0
        %523 = vmatpush1.msra.mxu0 0.0
        %524 = vmatprep.subr.mxu0 0.0
        %525 = vmatpush1.msra.mxu0 %v492
        %526 = vmatprep.subr.mxu0 0.0
        %527 = vmatpush2.msra.mxu0 0.0
        %528 = vmatprep.subr.mxu0 0.0
        %529 = vmatpush2.msra.mxu0 0.0
        %530 = vmatprep.subr.mxu0 0.0
        %531 = vmatpush2.msra.mxu0 0.0
        %532 = vmatprep.subr.mxu0 0.0
        %533 = vmatpush2.msra.mxu0 0.0
        %534 = vmatprep.subr.mxu0 0.0
        %535 = vmatpush2.msra.mxu0 0.0
        %536 = vmatprep.subr.mxu0 0.0
        %537 = vmatpush2.msra.mxu0 0.0
        %538 = vmatprep.subr.mxu0 0.0
        %539 = vmatpush2.msra.mxu0 0.0
        %540 = vmatprep.subr.mxu0 0.0
        %541 = vmatpush2.msra.mxu0 0.0
        %542 = vmatprep.subr.mxu0 0.0
        %543 = vmatpush2.msra.mxu0 0.0
        %544 = vmatprep.subr.mxu0 0.0
        %545 = vmatpush2.msra.mxu0 0.0
        %546 = vmatprep.subr.mxu0 0.0
        %547 = vmatpush2.msra.mxu0 0.0
        %548 = vmatprep.subr.mxu0 0.0
        %549 = vmatpush2.msra.mxu0 0.0
        %550 = vmatprep.subr.mxu0 0.0
        %551 = vmatpush2.msra.mxu0 0.0
        %552 = vmatprep.subr.mxu0 0.0
        %553 = vmatpush2.msra.mxu0 0.0
        %554 = vmatprep.subr.mxu0 0.0
        %555 = vmatpush2.msra.mxu0 0.0
        %556 = vmatprep.subr.mxu0 0.0
        %557 = vmatpush2.msra.mxu0 0.0
        %558 = vmatprep.mubr.f32.mxu0 0.0
        %559 = vmatmul.mubr.f32.gmra.mxu0 %v489
        %v560 = vpop.f32.mrf.mxu0
        %v561 = vadd.f32 0.0, %v560
        %v562 = vpop.f32.mrf.mxu0
        %563 = vdwg.mxu0
        %v564 = vadd.f32 %v398, %v561
        %s565 = scalar_lea.vmem [#allocation2], 256
        %v566 = vld [vmem:[%s565] sm:$0xff]
        %v567 = vld [vmem:[%s565 + $0x8] sm:$0xff]
        %v568 = vld [vmem:[%s565 + $0x10] sm:$0xff]
        %v569 = vld [vmem:[%s565 + $0x18] sm:$0xff]
        %v570 = vld [vmem:[%s565 + $0x20] sm:$0xff]
        %v571 = vld [vmem:[%s565 + $0x28] sm:$0xff]
        %v572 = vld [vmem:[%s565 + $0x30] sm:$0xff]
        %v573 = vld [vmem:[%s565 + $0x38] sm:$0xff]
        %v574 = vld [vmem:[%s565 + $0x40] sm:$0xff]
        %v575 = vld [vmem:[%s565 + $0x48] sm:$0xff]
        %v576 = vld [vmem:[%s565 + $0x50] sm:$0xff]
        %v577 = vld [vmem:[%s565 + $0x58] sm:$0xff]
        %v578 = vld [vmem:[%s565 + $0x60] sm:$0xff]
        %v579 = vld [vmem:[%s565 + $0x68] sm:$0xff]
        %v580 = vld [vmem:[%s565 + $0x70] sm:$0xff]
        %v581 = vld [vmem:[%s565 + $0x78] sm:$0xff]
        %582 = vmatprep.subr.mxu0 0.0
        %583 = vmatpush1.msra.mxu0 %v581
        %584 = vmatprep.subr.mxu0 0.0
        %585 = vmatpush1.msra.mxu0 %v580
        %586 = vmatprep.subr.mxu0 0.0
        %587 = vmatpush1.msra.mxu0 %v579
        %588 = vmatprep.subr.mxu0 0.0
        %589 = vmatpush1.msra.mxu0 %v578
        %590 = vmatprep.subr.mxu0 0.0
        %591 = vmatpush1.msra.mxu0 %v577
        %592 = vmatprep.subr.mxu0 0.0
        %593 = vmatpush1.msra.mxu0 %v576
        %594 = vmatprep.subr.mxu0 0.0
        %595 = vmatpush1.msra.mxu0 %v575
        %596 = vmatprep.subr.mxu0 0.0
        %597 = vmatpush1.msra.mxu0 %v574
        %598 = vmatprep.subr.mxu0 0.0
        %599 = vmatpush1.msra.mxu0 %v573
        %600 = vmatprep.subr.mxu0 0.0
        %601 = vmatpush1.msra.mxu0 %v572
        %602 = vmatprep.subr.mxu0 0.0
        %603 = vmatpush1.msra.mxu0 %v571
        %604 = vmatprep.subr.mxu0 0.0
        %605 = vmatpush1.msra.mxu0 %v570
        %606 = vmatprep.subr.mxu0 0.0
        %607 = vmatpush1.msra.mxu0 %v569
        %608 = vmatprep.subr.mxu0 0.0
        %609 = vmatpush1.msra.mxu0 %v568
        %610 = vmatprep.subr.mxu0 0.0
        %611 = vmatpush1.msra.mxu0 %v567
        %612 = vmatprep.subr.mxu0 0.0
        %613 = vmatpush1.msra.mxu0 %v566
        %614 = vmatprep.subr.mxu0 0.0
        %615 = vmatpush2.msra.mxu0 0.0
        %616 = vmatprep.subr.mxu0 0.0
        %617 = vmatpush2.msra.mxu0 0.0
        %618 = vmatprep.subr.mxu0 0.0
        %619 = vmatpush2.msra.mxu0 0.0
        %620 = vmatprep.subr.mxu0 0.0
        %621 = vmatpush2.msra.mxu0 0.0
        %622 = vmatprep.subr.mxu0 0.0
        %623 = vmatpush2.msra.mxu0 0.0
        %624 = vmatprep.subr.mxu0 0.0
        %625 = vmatpush2.msra.mxu0 0.0
        %626 = vmatprep.subr.mxu0 0.0
        %627 = vmatpush2.msra.mxu0 0.0
        %628 = vmatprep.subr.mxu0 0.0
        %629 = vmatpush2.msra.mxu0 0.0
        %630 = vmatprep.subr.mxu0 0.0
        %631 = vmatpush2.msra.mxu0 0.0
        %632 = vmatprep.subr.mxu0 0.0
        %633 = vmatpush2.msra.mxu0 0.0
        %634 = vmatprep.subr.mxu0 0.0
        %635 = vmatpush2.msra.mxu0 0.0
        %636 = vmatprep.subr.mxu0 0.0
        %637 = vmatpush2.msra.mxu0 0.0
        %638 = vmatprep.subr.mxu0 0.0
        %639 = vmatpush2.msra.mxu0 0.0
        %640 = vmatprep.subr.mxu0 0.0
        %641 = vmatpush2.msra.mxu0 0.0
        %642 = vmatprep.subr.mxu0 0.0
        %643 = vmatpush2.msra.mxu0 0.0
        %644 = vmatprep.subr.mxu0 0.0
        %645 = vmatpush2.msra.mxu0 0.0
        %646 = vmatprep.mubr.f32.mxu0 0.0
        %647 = vmatmul.mubr.f32.gmra.mxu0 %v231
        %v648 = vpop.f32.mrf.mxu0
        %v649 = vadd.f32 0.0, %v648
        %v650 = vpop.f32.mrf.mxu0
        %651 = vdwg.mxu0
        %s652 = scalar_lea.vmem %s1, 16
        %v653 = vld [vmem:[%s652] sm:$0xff]
        %v655 = vsel %vm320, %v653, 0
        %v658 = vsel %vm324, %v649, 0
        %660 = vmatprep.subr.mxu0 0.0
        %661 = vmatpush1.msra.mxu0 0.0
        %662 = vmatprep.subr.mxu0 0.0
        %663 = vmatpush1.msra.mxu0 0.0
        %664 = vmatprep.subr.mxu0 0.0
        %665 = vmatpush1.msra.mxu0 0.0
        %666 = vmatprep.subr.mxu0 0.0
        %667 = vmatpush1.msra.mxu0 0.0
        %668 = vmatprep.subr.mxu0 0.0
        %669 = vmatpush1.msra.mxu0 0.0
        %670 = vmatprep.subr.mxu0 0.0
        %671 = vmatpush1.msra.mxu0 0.0
        %672 = vmatprep.subr.mxu0 0.0
        %673 = vmatpush1.msra.mxu0 0.0
        %674 = vmatprep.subr.mxu0 0.0
        %675 = vmatpush1.msra.mxu0 0.0
        %676 = vmatprep.subr.mxu0 0.0
        %677 = vmatpush1.msra.mxu0 0.0
        %678 = vmatprep.subr.mxu0 0.0
        %679 = vmatpush1.msra.mxu0 0.0
        %680 = vmatprep.subr.mxu0 0.0
        %681 = vmatpush1.msra.mxu0 0.0
        %682 = vmatprep.subr.mxu0 0.0
        %683 = vmatpush1.msra.mxu0 0.0
        %684 = vmatprep.subr.mxu0 0.0
        %685 = vmatpush1.msra.mxu0 0.0
        %686 = vmatprep.subr.mxu0 0.0
        %687 = vmatpush1.msra.mxu0 0.0
        %688 = vmatprep.subr.mxu0 0.0
        %689 = vmatpush1.msra.mxu0 0.0
        %690 = vmatprep.subr.mxu0 0.0
        %691 = vmatpush1.msra.mxu0 %v658
        %692 = vmatprep.subr.mxu0 0.0
        %693 = vmatpush2.msra.mxu0 0.0
        %694 = vmatprep.subr.mxu0 0.0
        %695 = vmatpush2.msra.mxu0 0.0
        %696 = vmatprep.subr.mxu0 0.0
        %697 = vmatpush2.msra.mxu0 0.0
        %698 = vmatprep.subr.mxu0 0.0
        %699 = vmatpush2.msra.mxu0 0.0
        %700 = vmatprep.subr.mxu0 0.0
        %701 = vmatpush2.msra.mxu0 0.0
        %702 = vmatprep.subr.mxu0 0.0
        %703 = vmatpush2.msra.mxu0 0.0
        %704 = vmatprep.subr.mxu0 0.0
        %705 = vmatpush2.msra.mxu0 0.0
        %706 = vmatprep.subr.mxu0 0.0
        %707 = vmatpush2.msra.mxu0 0.0
        %708 = vmatprep.subr.mxu0 0.0
        %709 = vmatpush2.msra.mxu0 0.0
        %710 = vmatprep.subr.mxu0 0.0
        %711 = vmatpush2.msra.mxu0 0.0
        %712 = vmatprep.subr.mxu0 0.0
        %713 = vmatpush2.msra.mxu0 0.0
        %714 = vmatprep.subr.mxu0 0.0
        %715 = vmatpush2.msra.mxu0 0.0
        %716 = vmatprep.subr.mxu0 0.0
        %717 = vmatpush2.msra.mxu0 0.0
        %718 = vmatprep.subr.mxu0 0.0
        %719 = vmatpush2.msra.mxu0 0.0
        %720 = vmatprep.subr.mxu0 0.0
        %721 = vmatpush2.msra.mxu0 0.0
        %722 = vmatprep.subr.mxu0 0.0
        %723 = vmatpush2.msra.mxu0 0.0
        %724 = vmatprep.mubr.f32.mxu0 0.0
        %725 = vmatmul.mubr.f32.gmra.mxu0 %v655
        %v726 = vpop.f32.mrf.mxu0
        %v727 = vadd.f32 0.0, %v726
        %v728 = vpop.f32.mrf.mxu0
        %729 = vdwg.mxu0
        %v730 = vadd.f32 %v564, %v727
        %731 = vst [vmem:[%s199] sm:$0xff] %v730
        %s732 = sand.u32 %s115, 1
        %s733 = scalar_lea.sflag [#allocation5], %s732
        %s734 = sand.u32 %s115, 1
        %s735 = smul.addr %s734, 8
        %s736 = scalar_lea.vmem [#allocation4], %s735
        // Predicated region
        $region41: #{tpu_custom_call.1} parent=31 // pred_check
          %p737 = pneg %p125
        $region42: #{tpu_custom_call.1} parent=31 // pred_check_branch
          %739 = sbr.rel (%p737) target = $region44
        $region43: #{tpu_custom_call.1} parent=31 // pred_region
          %s741 = ssub.s32 128, 128
          %742 = vsyncadd %s733, %s741
          %s743 = smul.addr %s22, 2
          %s744 = sadd.s32 %s23, %s743
          %s745 = smul.addr %s744, 128
          %s746 = scalar_lea.hbm %s4, %s745
          %s748 = sshll.u32 %s736, 4
          %s749 = int_to_ptr.vmem [resolvable:$true] %s748
          %751 = dma.vmem_to_hbm [thread:$0]  %s749, 128, %s746, %s733
        $region44: #{tpu_custom_call.1} parent=31 // pred_fallthru
          _
      $region32: #{tpu_custom_call.1} parent=5 // pred_fallthru
        _
      %p752 = scmp.le.s32.totalorder 2, %s13
      // Predicated region
      $region45: #{tpu_custom_call.1} parent=5 // pred_check
        %p753 = pneg %p752
      $region46: #{tpu_custom_call.1} parent=5 // pred_check_branch
        %755 = sbr.rel (%p753) target = $region48
      $region47: #{tpu_custom_call.1} parent=5 // pred_region
        %s756 = ssub.s32 %s13, 2
        // Predicated region
        $region49: #{tpu_custom_call.1} parent=47 // pred_check
          %p757 = pneg %p131
        $region50: #{tpu_custom_call.1} parent=47 // pred_check_branch
          %759 = sbr.rel (%p757) target = $region52
        $region51: #{tpu_custom_call.1} parent=47 // pred_region
          %s760 = sand.u32 %s116, 1
          %s761 = scalar_lea.sflag [#allocation5], %s760
          %s762 = sand.u32 %s116, 1
          %s763 = smul.addr %s762, 8
          %s764 = scalar_lea.vmem [#allocation4], %s763
          %765 = dma.done %s761, 128
        $region52: #{tpu_custom_call.1} parent=47 // pred_fallthru
          _
      $region48: #{tpu_custom_call.1} parent=5 // pred_fallthru
        _
    $region6: #{tpu_custom_call.1} parent=1 // loop_footer
      %s17 = sadd.s32 1, %s13
    $region7: #{tpu_custom_call.1} parent=1 // loop_footer_branch
      %12 = sbr.rel target = $region3
    $region8: #{tpu_custom_call.1} parent=1 // loop_exit
      _
    %766 = vsyncpa [#allocation5], 1
    %s767 = scalar_lea.sflag [#allocation5], 1
    %768 = vsyncpa %s767, 1
  %769 = vsyncmov [#allocation3]
  %s770 = vpop.sfrf %769
  %p771 = scmp.eq.s32.totalorder %s770, 0
  %p772 = pneg %p771
  %774 = shalt.err (%p772)

</llo_original>
